<compile_context>
chip_gen: v5e
topology: v5e:2x2
jax: 0.10.0
libtpu: 0.0.40
codegen_flags: <defaults>
</compile_context>

<pallas_src>
import numpy as np
import jax
import jax.numpy as jnp
from jax.experimental import pallas as pl
from jax.experimental.pallas import tpu as pltpu


STATE_SIZE = 24
ACTION_SIZE = 2
NB_AGENTS = 2
FCS1_UNITS = 256
FC2_UNITS = 128
TILE_B = 128  # batch tile (128-512 recommended; amortizes ~0.35us/step grid overhead)


# ---------------------------------------------------------------------------
# Kernel: fused 3-layer MLP on one batch tile
# ---------------------------------------------------------------------------
def critic_kernel(s_ref, a_ref, w1s_ref, w1a_ref, b1_ref, w2_ref, b2_ref,
                  w3_ref, b3_ref, out_ref):
    # fcs1: concat(state, action) @ W1 + b1 == state @ W1_s + action @ W1_a + b1
    h1 = (jnp.dot(s_ref[...], w1s_ref[...], preferred_element_type=jnp.float32)
          + jnp.dot(a_ref[...], w1a_ref[...], preferred_element_type=jnp.float32)
          + b1_ref[...])
    h1 = jnp.maximum(h1, 0.0)                                      # relu -> (TILE_B, 256)

    h2 = jnp.dot(h1, w2_ref[...], preferred_element_type=jnp.float32) + b2_ref[...]
    h2 = jnp.maximum(h2, 0.0)                                      # relu -> (TILE_B, 128)

    # fc3 (128 -> 1): broadcast-multiply + lane reduce (VPU/XLU) instead of an N=1 MXU
    # matmul; w3 is stored as a (1, 128) row, b3 is a scalar in SMEM.
    q = jnp.sum(h2 * w3_ref[...], axis=-1, keepdims=True) + b3_ref[0]
    out_ref[...] = q.astype(out_ref.dtype)                         # (TILE_B, 1)


# ---------------------------------------------------------------------------
# Wrapper: batch-tiled pallas_call with weights resident in VMEM
# ---------------------------------------------------------------------------
def critic_forward(state, action, params, *, tile_b=TILE_B):
    """state: (B, state_size*nb_agents), action: (B, action_size*nb_agents)."""
    w1_s, w1_a, b1, w2, b2, w3, b3 = params
    state = state.astype(jnp.float32)
    action = action.astype(jnp.float32)     # matches `action.float()` in the PyTorch module

    b, d_s = state.shape
    d_a = action.shape[1]

    tb = min(tile_b, b)
    pad = (-b) % tb
    if pad:                                 # pad batch to a multiple of the tile
        state = jnp.pad(state, ((0, pad), (0, 0)))
        action = jnp.pad(action, ((0, pad), (0, 0)))
    bp = b + pad
    grid = (bp // tb,)

    act_spec = lambda d: pl.BlockSpec((tb, d), lambda i: (i, 0))          # pipelined tiles
    res_spec = lambda r, c: pl.BlockSpec((r, c), lambda i: (0, 0))        # VMEM-resident

    out = pl.pallas_call(
        critic_kernel,
        out_shape=jax.ShapeDtypeStruct((bp, 1), jnp.float32),
        grid=grid,
        in_specs=[
            act_spec(d_s),                                        # state tile
            act_spec(d_a),                                        # action tile
            res_spec(d_s, FCS1_UNITS),                            # w1_s (48, 256)
            res_spec(d_a, FCS1_UNITS),                            # w1_a (4, 256)
            res_spec(1, FCS1_UNITS),                              # b1   (1, 256)
            res_spec(FCS1_UNITS, FC2_UNITS),                      # w2   (256, 128)
            res_spec(1, FC2_UNITS),                               # b2   (1, 128)
            res_spec(1, FC2_UNITS),                               # w3   (1, 128) row
            pl.BlockSpec(memory_space=pltpu.MemorySpace.SMEM),    # b3 scalar in SMEM
        ],
        out_specs=pl.BlockSpec((tb, 1), lambda i: (i, 0)),
        compiler_params=pltpu.CompilerParams(
            dimension_semantics=("parallel",)),   # v7x: shard batch tiles across both TCs
    )(state, action, w1_s, w1_a, b1, w2, b2, w3, b3)

    return out[:b] if pad else out


# ---------------------------------------------------------------------------
# Deterministic parameter init (mirrors the PyTorch module's shapes / init ranges)
# ---------------------------------------------------------------------------
def init_critic_params(key, state_size, action_size, nb_agents,
                       fcs1_units=FCS1_UNITS, fc2_units=FC2_UNITS):
    d_s = state_size * nb_agents
    d_a = action_size * nb_agents
    d_in = d_s + d_a
    k1, k2, k3, k4, k5, k6 = jax.random.split(key, 6)

    def unif(k, shape, lim):
        return jax.random.uniform(k, shape, jnp.float32, minval=-lim, maxval=lim)

    lim1 = 1.0 / np.sqrt(d_in)
    lim2 = 1.0 / np.sqrt(fcs1_units)
    w1 = unif(k1, (d_in, fcs1_units), lim1)       # stored (in, out)
    b1 = unif(k2, (1, fcs1_units), lim1)
    w2 = unif(k3, (fcs1_units, fc2_units), lim2)
    b2 = unif(k4, (1, fc2_units), lim2)
    w3 = unif(k5, (1, fc2_units), 0.003)          # fc3 weight as a (1, 128) row
    b3 = unif(k6, (1,), 1.0 / np.sqrt(fc2_units))
    # split W1 so the kernel consumes state / action directly (no concat)
    w1_s, w1_a = w1[:d_s], w1[d_s:]
    return (w1_s, w1_a, b1, w2, b2, w3, b3)


# ---------------------------------------------------------------------------
# Pure-JAX reference for sanity checking (same math as the PyTorch module)
# ---------------------------------------------------------------------------
def critic_ref(state, action, params):
    w1_s, w1_a, b1, w2, b2, w3, b3 = params
    xs = jnp.concatenate([state, action.astype(jnp.float32)], axis=1)
    w1 = jnp.concatenate([w1_s, w1_a], axis=0)
    h1 = jax.nn.relu(xs @ w1 + b1)
    h2 = jax.nn.relu(h1 @ w2 + b2)
    return h2 @ w3.T + b3


if __name__ == "__main__":
    # Tennis env: state_size=24, action_size=2, nb_agents=2 -> feature dims 48 / 4.
    state_size, action_size, nb_agents = STATE_SIZE, ACTION_SIZE, NB_AGENTS
    batch = 256   # replay-batch sized; exercises a 2-step batch grid with TILE_B=128

    key = jax.random.PRNGKey(0)
    kp, ks, ka = jax.random.split(key, 3)

    params = init_critic_params(kp, state_size, action_size, nb_agents)
    state = jax.random.normal(ks, (batch, state_size * nb_agents), jnp.float32)
    action = jax.random.uniform(ka, (batch, action_size * nb_agents), jnp.float32,
                                minval=-1.0, maxval=1.0)

    q = jax.block_until_ready(critic_forward(state, action, params))

    q_ref = critic_ref(state, action, params)
    np.testing.assert_allclose(np.asarray(q), np.asarray(q_ref), rtol=1e-5, atol=1e-5)

    print("KERNEL_OK")
</pallas_src>

<mosaic_0001>
module attributes {stable_mosaic.version = 11 : i64} {
  func.func @critic_kernel(%arg0: i32, %arg1: memref<128x48xf32, #tpu.memory_space<vmem>>, %arg2: memref<128x4xf32, #tpu.memory_space<vmem>>, %arg3: memref<48x256xf32, #tpu.memory_space<vmem>>, %arg4: memref<4x256xf32, #tpu.memory_space<vmem>>, %arg5: memref<1x256xf32, #tpu.memory_space<vmem>>, %arg6: memref<256x128xf32, #tpu.memory_space<vmem>>, %arg7: memref<1x128xf32, #tpu.memory_space<vmem>>, %arg8: memref<1x128xf32, #tpu.memory_space<vmem>>, %arg9: memref<1xf32, #tpu.memory_space<smem>>, %arg10: memref<128x1xf32, #tpu.memory_space<vmem>>) attributes {dimension_semantics = [#tpu.dimension_semantics<parallel>], iteration_bounds = array<i64: 2>, scalar_prefetch = 0 : i64, scratch_operands = 0 : i64, tpu.core_type = #tpu.core_type<tc>, window_params = [{transform_indices = @transform_0, window_bounds = array<i64: 128, 48>}, {transform_indices = @transform_1, window_bounds = array<i64: 128, 4>}, {pipeline_mode = #tpu.pipeline_mode<synchronous>, transform_indices = @transform_2, window_bounds = array<i64: 48, 256>}, {pipeline_mode = #tpu.pipeline_mode<synchronous>, transform_indices = @transform_3, window_bounds = array<i64: 4, 256>}, {pipeline_mode = #tpu.pipeline_mode<synchronous>, transform_indices = @transform_4, window_bounds = array<i64: 1, 256>}, {pipeline_mode = #tpu.pipeline_mode<synchronous>, transform_indices = @transform_5, window_bounds = array<i64: 256, 128>}, {pipeline_mode = #tpu.pipeline_mode<synchronous>, transform_indices = @transform_6, window_bounds = array<i64: 1, 128>}, {pipeline_mode = #tpu.pipeline_mode<synchronous>, transform_indices = @transform_7, window_bounds = array<i64: 1, 128>}, {transform_indices = @transform_8, window_bounds = array<i64: 1>}, {transform_indices = @transform_9, window_bounds = array<i64: 128, 1>}]} {
    %c0 = arith.constant 0 : index
    %c0_0 = arith.constant 0 : index
    %0 = vector.load %arg1[%c0, %c0_0] : memref<128x48xf32, #tpu.memory_space<vmem>>, vector<128x48xf32>
    %c0_1 = arith.constant 0 : index
    %c0_2 = arith.constant 0 : index
    %1 = vector.load %arg3[%c0_1, %c0_2] : memref<48x256xf32, #tpu.memory_space<vmem>>, vector<48x256xf32>
    %cst = arith.constant dense<0.000000e+00> : vector<128x256xf32>
    %2 = tpu.matmul %0, %1, %cst {dimension_numbers = #tpu.dot_dimension_numbers<[1], [0], [0], [1], [0, 0, 1, 1], [], []>} : vector<128x48xf32>, vector<48x256xf32>, vector<128x256xf32> -> vector<128x256xf32>
    %c0_3 = arith.constant 0 : index
    %c0_4 = arith.constant 0 : index
    %3 = vector.load %arg2[%c0_3, %c0_4] : memref<128x4xf32, #tpu.memory_space<vmem>>, vector<128x4xf32>
    %c0_5 = arith.constant 0 : index
    %c0_6 = arith.constant 0 : index
    %4 = vector.load %arg4[%c0_5, %c0_6] : memref<4x256xf32, #tpu.memory_space<vmem>>, vector<4x256xf32>
    %cst_7 = arith.constant dense<0.000000e+00> : vector<128x256xf32>
    %5 = tpu.matmul %3, %4, %cst_7 {dimension_numbers = #tpu.dot_dimension_numbers<[1], [0], [0], [1], [0, 0, 1, 1], [], []>} : vector<128x4xf32>, vector<4x256xf32>, vector<128x256xf32> -> vector<128x256xf32>
    %6 = arith.addf %2, %5 : vector<128x256xf32>
    %c0_8 = arith.constant 0 : index
    %c0_9 = arith.constant 0 : index
    %7 = vector.load %arg5[%c0_8, %c0_9] : memref<1x256xf32, #tpu.memory_space<vmem>>, vector<1x256xf32>
    %8 = vector.broadcast %7 : vector<1x256xf32> to vector<128x256xf32>
    %9 = arith.addf %6, %8 : vector<128x256xf32>
    %cst_10 = arith.constant 0.000000e+00 : f32
    %10 = vector.broadcast %cst_10 : f32 to vector<128x256xf32>
    %11 = arith.maximumf %9, %10 : vector<128x256xf32>
    %c0_11 = arith.constant 0 : index
    %c0_12 = arith.constant 0 : index
    %12 = vector.load %arg6[%c0_11, %c0_12] : memref<256x128xf32, #tpu.memory_space<vmem>>, vector<256x128xf32>
    %cst_13 = arith.constant dense<0.000000e+00> : vector<128x128xf32>
    %13 = tpu.matmul %11, %12, %cst_13 {dimension_numbers = #tpu.dot_dimension_numbers<[1], [0], [0], [1], [0, 0, 1, 1], [], []>} : vector<128x256xf32>, vector<256x128xf32>, vector<128x128xf32> -> vector<128x128xf32>
    %c0_14 = arith.constant 0 : index
    %c0_15 = arith.constant 0 : index
    %14 = vector.load %arg7[%c0_14, %c0_15] : memref<1x128xf32, #tpu.memory_space<vmem>>, vector<1x128xf32>
    %15 = vector.broadcast %14 : vector<1x128xf32> to vector<128x128xf32>
    %16 = arith.addf %13, %15 : vector<128x128xf32>
    %cst_16 = arith.constant 0.000000e+00 : f32
    %17 = vector.broadcast %cst_16 : f32 to vector<128x128xf32>
    %18 = arith.maximumf %16, %17 : vector<128x128xf32>
    %c0_17 = arith.constant 0 : index
    %c0_18 = arith.constant 0 : index
    %19 = vector.load %arg8[%c0_17, %c0_18] : memref<1x128xf32, #tpu.memory_space<vmem>>, vector<1x128xf32>
    %20 = vector.broadcast %19 : vector<1x128xf32> to vector<128x128xf32>
    %21 = arith.mulf %18, %20 : vector<128x128xf32>
    %cst_19 = arith.constant dense<0.000000e+00> : vector<128xf32>
    %22 = vector.multi_reduction <add>, %21, %cst_19 [1] : vector<128x128xf32> to vector<128xf32>
    %23 = vector.shape_cast %22 : vector<128xf32> to vector<128x1xf32>
    %c0_20 = arith.constant 0 : index
    %24 = memref.load %arg9[%c0_20] : memref<1xf32, #tpu.memory_space<smem>>
    %25 = vector.broadcast %24 : f32 to vector<128x1xf32>
    %26 = arith.addf %23, %25 : vector<128x1xf32>
    %c0_21 = arith.constant 0 : index
    %c0_22 = arith.constant 0 : index
    %27 = vector.load %arg10[%c0_21, %c0_22] : memref<128x1xf32, #tpu.memory_space<vmem>>, vector<128x1xf32>
    tpu.vector_store %arg10[%c0_21, %c0_22], %26 {strides = array<i32>} : memref<128x1xf32, #tpu.memory_space<vmem>>, vector<128x1xf32>,
    return
  }
  func.func @transform_0(%arg0: i32) -> (i32, i32) {
    %c0_i32 = arith.constant 0 : i32
    %c0_i32_0 = arith.constant 0 : i32
    return %arg0, %c0_i32 : i32, i32
  }
  func.func @transform_1(%arg0: i32) -> (i32, i32) {
    %c0_i32 = arith.constant 0 : i32
    %c0_i32_0 = arith.constant 0 : i32
    return %arg0, %c0_i32 : i32, i32
  }
  func.func @transform_2(%arg0: i32) -> (i32, i32) {
    %c0_i32 = arith.constant 0 : i32
    %c0_i32_0 = arith.constant 0 : i32
    %c0_i32_1 = arith.constant 0 : i32
    return %c0_i32, %c0_i32_0 : i32, i32
  }
  func.func @transform_3(%arg0: i32) -> (i32, i32) {
    %c0_i32 = arith.constant 0 : i32
    %c0_i32_0 = arith.constant 0 : i32
    %c0_i32_1 = arith.constant 0 : i32
    return %c0_i32, %c0_i32_0 : i32, i32
  }
  func.func @transform_4(%arg0: i32) -> (i32, i32) {
    %c0_i32 = arith.constant 0 : i32
    %c0_i32_0 = arith.constant 0 : i32
    %c0_i32_1 = arith.constant 0 : i32
    return %c0_i32, %c0_i32_0 : i32, i32
  }
  func.func @transform_5(%arg0: i32) -> (i32, i32) {
    %c0_i32 = arith.constant 0 : i32
    %c0_i32_0 = arith.constant 0 : i32
    %c0_i32_1 = arith.constant 0 : i32
    return %c0_i32, %c0_i32_0 : i32, i32
  }
  func.func @transform_6(%arg0: i32) -> (i32, i32) {
    %c0_i32 = arith.constant 0 : i32
    %c0_i32_0 = arith.constant 0 : i32
    %c0_i32_1 = arith.constant 0 : i32
    return %c0_i32, %c0_i32_0 : i32, i32
  }
  func.func @transform_7(%arg0: i32) -> (i32, i32) {
    %c0_i32 = arith.constant 0 : i32
    %c0_i32_0 = arith.constant 0 : i32
    %c0_i32_1 = arith.constant 0 : i32
    return %c0_i32, %c0_i32_0 : i32, i32
  }
  func.func @transform_8(%arg0: i32) -> i32 {
    %c0_i32 = arith.constant 0 : i32
    %c0_i32_0 = arith.constant 0 : i32
    return %c0_i32 : i32
  }
  func.func @transform_9(%arg0: i32) -> (i32, i32) {
    %c0_i32 = arith.constant 0 : i32
    %c0_i32_0 = arith.constant 0 : i32
    return %arg0, %c0_i32 : i32, i32
  }
}

</mosaic_0001>

<llo_original>
// kernel: tpu_custom_call.1
$region0: #{tpu_custom_call.1}
  #allocation0 [shape = 'u32[]', space=smem, size = 0x4, offset = 0x4, fixed_abs, tag = 'smem constant byte address 0x4 - core index']
  #allocation1 [shape = 'u32[72,128]{1,0:T(1,128)}', space=vmem, size = 0x9000, scoped, tag = 'internal scratch']
  #allocation2 [shape = 'f32[1]{0:T(128)S(6)}', space=smem, size = 0x200, scoped, tag = 'scoped memory for tpu_custom_call.1']
  %s0 = inlined_call_operand.vmem [shape: f32[256,48], index: 0, kind: input, shape index: {}]
  %s1 = inlined_call_operand.vmem [shape: f32[256,4], index: 1, kind: input, shape index: {}]
  %s2 = inlined_call_operand.vmem [shape: f32[48,256], index: 2, kind: input, shape index: {}]
  %s3 = inlined_call_operand.vmem [shape: f32[4,256], index: 3, kind: input, shape index: {}]
  %s4 = inlined_call_operand.vmem [shape: f32[1,256], index: 4, kind: input, shape index: {}]
  %s5 = inlined_call_operand.vmem [shape: f32[256,128], index: 5, kind: input, shape index: {}]
  %s6 = inlined_call_operand.vmem [shape: f32[1,128], index: 6, kind: input, shape index: {}]
  %s7 = inlined_call_operand.vmem [shape: f32[1,128], index: 7, kind: input, shape index: {}]
  %s8 = inlined_call_operand.<no memory space> [shape: f32[1], index: 8, kind: input, shape index: {}]
  %s9 = inlined_call_operand.vmem [shape: f32[256,1], index: 9, kind: output, shape index: {}]
  %s10 = sld [smem:[#allocation0]]
  $region69: #{tpu_custom_call.1} parent=0
    _
  %s12 = ssub.s32 1, %s10
  %s13 = scalar_select 0, %s12, %s10
  %14 = sst [smem:[#allocation2]] %s8
  loop: start=0, step=1, limit=4
  $region2: #{tpu_custom_call.1} parent=0 // loop_pre_header
    _
  $region3: #{tpu_custom_call.1} parent=0 // loop_header
    %s16 = sphi 0, %s20
    %p17 = scmp.ge.s32.totalorder %s16, 4
    %s26 = sphi 0, %s28
    %s29 = sphi 0, %s26
    %s30 = sphi 0, %s29
    %s46 = sphi 0, %s30
    %s52 = sphi 0, %s54
    %s55 = sphi 0, %s52
    %s56 = sphi 0, %s55
    %s72 = sphi 0, %s56
    %s76 = sphi 0, %s76
    %s78 = sphi 0, %s76
    %s79 = sphi 0, %s78
    %s93 = sphi 0, %s79
    %s97 = sphi 0, %s97
    %s99 = sphi 0, %s97
    %s100 = sphi 0, %s99
    %s114 = sphi 0, %s100
    %s118 = sphi 0, %s118
    %s120 = sphi 0, %s118
    %s121 = sphi 0, %s120
    %s135 = sphi 0, %s121
    %s139 = sphi 0, %s139
    %s141 = sphi 0, %s139
    %s142 = sphi 0, %s141
    %s156 = sphi 0, %s142
    %s160 = sphi 0, %s160
    %s162 = sphi 0, %s160
    %s163 = sphi 0, %s162
    %s177 = sphi 0, %s163
    %s181 = sphi 0, %s181
    %s183 = sphi 0, %s181
    %s184 = sphi 0, %s183
    %s198 = sphi 0, %s184
    %s202 = sphi 0, %s202
    %s204 = sphi 0, %s202
    %s205 = sphi 0, %s204
    %s219 = sphi 0, %s205
    %s225 = sphi 0, %s227
    %s228 = sphi 0, %s225
    %s229 = sphi 0, %s228
    %s245 = sphi 0, %s229
  $region4: #{tpu_custom_call.1} parent=0 // loop_header_branch
    %19 = sbr.rel (%p17) target = $region8
  $region5: #{tpu_custom_call.1} parent=0 // loop_body
    %s21 = ssub.s32 %s16, 1
    %s22 = ssub.s32 %s16, 2
    %s23 = sadd.s32 %s16, 1
    %s24 = ssub.s32 %s16, %s23
    %p25 = scmp.eq.s32.totalorder %s24, 0
    %s27 = sadd.s32 %s26, 1
    %s28 = scalar_select %p25, %s26, %s27
    %p31 = pneg %p25
    %p32 = scmp.eq.s32.totalorder %s16, 1
    %p33 = por %p31, %p32
    %p34 = scmp.ne.s32.totalorder %s26, %s29
    %p35 = scmp.eq.s32.totalorder %s16, 0
    %p36 = por %p34, %p35
    %p37 = scmp.ne.s32.totalorder %s26, %s29
    %p38 = scmp.eq.s32.totalorder %s21, 1
    %p39 = por %p37, %p38
    %p40 = scmp.ne.s32.totalorder %s29, %s30
    %p41 = scmp.eq.s32.totalorder %s21, 0
    %p42 = por %p40, %p41
    %p43 = scmp.ne.s32.totalorder %s29, %s30
    %p44 = scmp.eq.s32.totalorder %s22, 1
    %p45 = por %p43, %p44
    %p47 = scmp.ne.s32.totalorder %s30, %s46
    %p48 = scmp.eq.s32.totalorder %s22, 0
    %p49 = por %p47, %p48
    %s50 = ssub.s32 %s16, %s23
    %p51 = scmp.eq.s32.totalorder %s50, 0
    %s53 = sadd.s32 %s52, 1
    %s54 = scalar_select %p51, %s52, %s53
    %p57 = pneg %p51
    %p58 = scmp.eq.s32.totalorder %s16, 1
    %p59 = por %p57, %p58
    %p60 = scmp.ne.s32.totalorder %s52, %s55
    %p61 = scmp.eq.s32.totalorder %s16, 0
    %p62 = por %p60, %p61
    %p63 = scmp.ne.s32.totalorder %s52, %s55
    %p64 = scmp.eq.s32.totalorder %s21, 1
    %p65 = por %p63, %p64
    %p66 = scmp.ne.s32.totalorder %s55, %s56
    %p67 = scmp.eq.s32.totalorder %s21, 0
    %p68 = por %p66, %p67
    %p69 = scmp.ne.s32.totalorder %s55, %s56
    %p70 = scmp.eq.s32.totalorder %s22, 1
    %p71 = por %p69, %p70
    %p73 = scmp.ne.s32.totalorder %s56, %s72
    %p74 = scmp.eq.s32.totalorder %s22, 0
    %p75 = por %p73, %p74
    %s77 = sadd.s32 %s76, 1
    %p80 = scmp.eq.s32.totalorder %s16, 1
    %p81 = scmp.ne.s32.totalorder %s76, %s78
    %p82 = scmp.eq.s32.totalorder %s16, 0
    %p83 = por %p81, %p82
    %p84 = scmp.ne.s32.totalorder %s76, %s78
    %p85 = scmp.eq.s32.totalorder %s21, 1
    %p86 = por %p84, %p85
    %p87 = scmp.ne.s32.totalorder %s78, %s79
    %p88 = scmp.eq.s32.totalorder %s21, 0
    %p89 = por %p87, %p88
    %p90 = scmp.ne.s32.totalorder %s78, %s79
    %p91 = scmp.eq.s32.totalorder %s22, 1
    %p92 = por %p90, %p91
    %p94 = scmp.ne.s32.totalorder %s79, %s93
    %p95 = scmp.eq.s32.totalorder %s22, 0
    %p96 = por %p94, %p95
    %s98 = sadd.s32 %s97, 1
    %p101 = scmp.eq.s32.totalorder %s16, 1
    %p102 = scmp.ne.s32.totalorder %s97, %s99
    %p103 = scmp.eq.s32.totalorder %s16, 0
    %p104 = por %p102, %p103
    %p105 = scmp.ne.s32.totalorder %s97, %s99
    %p106 = scmp.eq.s32.totalorder %s21, 1
    %p107 = por %p105, %p106
    %p108 = scmp.ne.s32.totalorder %s99, %s100
    %p109 = scmp.eq.s32.totalorder %s21, 0
    %p110 = por %p108, %p109
    %p111 = scmp.ne.s32.totalorder %s99, %s100
    %p112 = scmp.eq.s32.totalorder %s22, 1
    %p113 = por %p111, %p112
    %p115 = scmp.ne.s32.totalorder %s100, %s114
    %p116 = scmp.eq.s32.totalorder %s22, 0
    %p117 = por %p115, %p116
    %s119 = sadd.s32 %s118, 1
    %p122 = scmp.eq.s32.totalorder %s16, 1
    %p123 = scmp.ne.s32.totalorder %s118, %s120
    %p124 = scmp.eq.s32.totalorder %s16, 0
    %p125 = por %p123, %p124
    %p126 = scmp.ne.s32.totalorder %s118, %s120
    %p127 = scmp.eq.s32.totalorder %s21, 1
    %p128 = por %p126, %p127
    %p129 = scmp.ne.s32.totalorder %s120, %s121
    %p130 = scmp.eq.s32.totalorder %s21, 0
    %p131 = por %p129, %p130
    %p132 = scmp.ne.s32.totalorder %s120, %s121
    %p133 = scmp.eq.s32.totalorder %s22, 1
    %p134 = por %p132, %p133
    %p136 = scmp.ne.s32.totalorder %s121, %s135
    %p137 = scmp.eq.s32.totalorder %s22, 0
    %p138 = por %p136, %p137
    %s140 = sadd.s32 %s139, 1
    %p143 = scmp.eq.s32.totalorder %s16, 1
    %p144 = scmp.ne.s32.totalorder %s139, %s141
    %p145 = scmp.eq.s32.totalorder %s16, 0
    %p146 = por %p144, %p145
    %p147 = scmp.ne.s32.totalorder %s139, %s141
    %p148 = scmp.eq.s32.totalorder %s21, 1
    %p149 = por %p147, %p148
    %p150 = scmp.ne.s32.totalorder %s141, %s142
    %p151 = scmp.eq.s32.totalorder %s21, 0
    %p152 = por %p150, %p151
    %p153 = scmp.ne.s32.totalorder %s141, %s142
    %p154 = scmp.eq.s32.totalorder %s22, 1
    %p155 = por %p153, %p154
    %p157 = scmp.ne.s32.totalorder %s142, %s156
    %p158 = scmp.eq.s32.totalorder %s22, 0
    %p159 = por %p157, %p158
    %s161 = sadd.s32 %s160, 1
    %p164 = scmp.eq.s32.totalorder %s16, 1
    %p165 = scmp.ne.s32.totalorder %s160, %s162
    %p166 = scmp.eq.s32.totalorder %s16, 0
    %p167 = por %p165, %p166
    %p168 = scmp.ne.s32.totalorder %s160, %s162
    %p169 = scmp.eq.s32.totalorder %s21, 1
    %p170 = por %p168, %p169
    %p171 = scmp.ne.s32.totalorder %s162, %s163
    %p172 = scmp.eq.s32.totalorder %s21, 0
    %p173 = por %p171, %p172
    %p174 = scmp.ne.s32.totalorder %s162, %s163
    %p175 = scmp.eq.s32.totalorder %s22, 1
    %p176 = por %p174, %p175
    %p178 = scmp.ne.s32.totalorder %s163, %s177
    %p179 = scmp.eq.s32.totalorder %s22, 0
    %p180 = por %p178, %p179
    %s182 = sadd.s32 %s181, 1
    %p185 = scmp.eq.s32.totalorder %s16, 1
    %p186 = scmp.ne.s32.totalorder %s181, %s183
    %p187 = scmp.eq.s32.totalorder %s16, 0
    %p188 = por %p186, %p187
    %p189 = scmp.ne.s32.totalorder %s181, %s183
    %p190 = scmp.eq.s32.totalorder %s21, 1
    %p191 = por %p189, %p190
    %p192 = scmp.ne.s32.totalorder %s183, %s184
    %p193 = scmp.eq.s32.totalorder %s21, 0
    %p194 = por %p192, %p193
    %p195 = scmp.ne.s32.totalorder %s183, %s184
    %p196 = scmp.eq.s32.totalorder %s22, 1
    %p197 = por %p195, %p196
    %p199 = scmp.ne.s32.totalorder %s184, %s198
    %p200 = scmp.eq.s32.totalorder %s22, 0
    %p201 = por %p199, %p200
    %s203 = sadd.s32 %s202, 1
    %p206 = scmp.eq.s32.totalorder %s16, 1
    %p207 = scmp.ne.s32.totalorder %s202, %s204
    %p208 = scmp.eq.s32.totalorder %s16, 0
    %p209 = por %p207, %p208
    %p210 = scmp.ne.s32.totalorder %s202, %s204
    %p211 = scmp.eq.s32.totalorder %s21, 1
    %p212 = por %p210, %p211
    %p213 = scmp.ne.s32.totalorder %s204, %s205
    %p214 = scmp.eq.s32.totalorder %s21, 0
    %p215 = por %p213, %p214
    %p216 = scmp.ne.s32.totalorder %s204, %s205
    %p217 = scmp.eq.s32.totalorder %s22, 1
    %p218 = por %p216, %p217
    %p220 = scmp.ne.s32.totalorder %s205, %s219
    %p221 = scmp.eq.s32.totalorder %s22, 0
    %p222 = por %p220, %p221
    %s223 = ssub.s32 %s16, %s23
    %p224 = scmp.eq.s32.totalorder %s223, 0
    %s226 = sadd.s32 %s225, 1
    %s227 = scalar_select %p224, %s225, %s226
    %p230 = pneg %p224
    %p231 = scmp.eq.s32.totalorder %s16, 1
    %p232 = por %p230, %p231
    %p233 = scmp.ne.s32.totalorder %s225, %s228
    %p234 = scmp.eq.s32.totalorder %s16, 0
    %p235 = por %p233, %p234
    %p236 = scmp.ne.s32.totalorder %s225, %s228
    %p237 = scmp.eq.s32.totalorder %s21, 1
    %p238 = por %p236, %p237
    %p239 = scmp.ne.s32.totalorder %s228, %s229
    %p240 = scmp.eq.s32.totalorder %s21, 0
    %p241 = por %p239, %p240
    %p242 = scmp.ne.s32.totalorder %s228, %s229
    %p243 = scmp.eq.s32.totalorder %s22, 1
    %p244 = por %p242, %p243
    %p246 = scmp.ne.s32.totalorder %s229, %s245
    %p247 = scmp.eq.s32.totalorder %s22, 0
    %p248 = por %p246, %p247
    %p249 = scmp.le.s32.totalorder 1, %s16
    %p250 = scmp.lt.s32.totalorder %s16, 3
    %p251 = pnand %p249, %p250
    %p252 = pneg %p251
    // Predicated region
    $region9: #{tpu_custom_call.1} parent=5 // pred_check
      _
    $region10: #{tpu_custom_call.1} parent=5 // pred_check_branch
      %254 = sbr.rel (%p251) target = $region12
    $region11: #{tpu_custom_call.1} parent=5 // pred_region
      %s255 = ssub.s32 %s16, 1
      // Predicated region
      $region13: #{tpu_custom_call.1} parent=11 // pred_check
        %p256 = pneg %p89
      $region14: #{tpu_custom_call.1} parent=11 // pred_check_branch
        %258 = sbr.rel (%p256) target = $region16
      $region15: #{tpu_custom_call.1} parent=11 // pred_region
        _
      $region16: #{tpu_custom_call.1} parent=11 // pred_fallthru
        _
      // Predicated region
      $region17: #{tpu_custom_call.1} parent=11 // pred_check
        %p259 = pneg %p110
      $region18: #{tpu_custom_call.1} parent=11 // pred_check_branch
        %261 = sbr.rel (%p259) target = $region20
      $region19: #{tpu_custom_call.1} parent=11 // pred_region
        _
      $region20: #{tpu_custom_call.1} parent=11 // pred_fallthru
        _
      // Predicated region
      $region21: #{tpu_custom_call.1} parent=11 // pred_check
        %p262 = pneg %p131
      $region22: #{tpu_custom_call.1} parent=11 // pred_check_branch
        %264 = sbr.rel (%p262) target = $region24
      $region23: #{tpu_custom_call.1} parent=11 // pred_region
        _
      $region24: #{tpu_custom_call.1} parent=11 // pred_fallthru
        _
      // Predicated region
      $region25: #{tpu_custom_call.1} parent=11 // pred_check
        %p265 = pneg %p152
      $region26: #{tpu_custom_call.1} parent=11 // pred_check_branch
        %267 = sbr.rel (%p265) target = $region28
      $region27: #{tpu_custom_call.1} parent=11 // pred_region
        _
      $region28: #{tpu_custom_call.1} parent=11 // pred_fallthru
        _
      // Predicated region
      $region29: #{tpu_custom_call.1} parent=11 // pred_check
        %p268 = pneg %p173
      $region30: #{tpu_custom_call.1} parent=11 // pred_check_branch
        %270 = sbr.rel (%p268) target = $region32
      $region31: #{tpu_custom_call.1} parent=11 // pred_region
        _
      $region32: #{tpu_custom_call.1} parent=11 // pred_fallthru
        _
      // Predicated region
      $region33: #{tpu_custom_call.1} parent=11 // pred_check
        %p271 = pneg %p194
      $region34: #{tpu_custom_call.1} parent=11 // pred_check_branch
        %273 = sbr.rel (%p271) target = $region36
      $region35: #{tpu_custom_call.1} parent=11 // pred_region
        _
      $region36: #{tpu_custom_call.1} parent=11 // pred_fallthru
        _
      // Predicated region
      $region37: #{tpu_custom_call.1} parent=11 // pred_check
        %p274 = pneg %p215
      $region38: #{tpu_custom_call.1} parent=11 // pred_check_branch
        %276 = sbr.rel (%p274) target = $region40
      $region39: #{tpu_custom_call.1} parent=11 // pred_region
        _
      $region40: #{tpu_custom_call.1} parent=11 // pred_fallthru
        _
    $region12: #{tpu_custom_call.1} parent=5 // pred_fallthru
      _
    %p277 = scmp.lt.s32.totalorder %s16, 2
    // Predicated region
    $region41: #{tpu_custom_call.1} parent=5 // pred_check
      %p278 = pneg %p277
    $region42: #{tpu_custom_call.1} parent=5 // pred_check_branch
      %280 = sbr.rel (%p278) target = $region44
    $region43: #{tpu_custom_call.1} parent=5 // pred_region
      // Predicated region
      $region45: #{tpu_custom_call.1} parent=43 // pred_check
        %p281 = pneg %p36
      $region46: #{tpu_custom_call.1} parent=43 // pred_check_branch
        %283 = sbr.rel (%p281) target = $region48
      $region47: #{tpu_custom_call.1} parent=43 // pred_region
        %s284 = smul.u32 16, %s16
        %p285 = scmp.lt.s32.totalorder %s284, 31
        %s286 = scalar_select %p285, %s284, 31
        %s287 = smul.addr %s286, 8
        %s288 = scalar_lea.vmem %s0, %s287
        %s289 = smul.u32 16, %s16
      $region48: #{tpu_custom_call.1} parent=43 // pred_fallthru
        _
      // Predicated region
      $region49: #{tpu_custom_call.1} parent=43 // pred_check
        %p290 = pneg %p62
      $region50: #{tpu_custom_call.1} parent=43 // pred_check_branch
        %292 = sbr.rel (%p290) target = $region52
      $region51: #{tpu_custom_call.1} parent=43 // pred_region
        %s293 = smul.u32 16, %s16
        %p294 = scmp.lt.s32.totalorder %s293, 31
        %s295 = scalar_select %p294, %s293, 31
        %s296 = smul.addr %s295, 8
        %s297 = scalar_lea.vmem %s1, %s296
        %s298 = smul.u32 16, %s16
      $region52: #{tpu_custom_call.1} parent=43 // pred_fallthru
        _
    $region44: #{tpu_custom_call.1} parent=5 // pred_fallthru
      _
    %p299 = scmp.le.s32.totalorder 1, %s16
    %p300 = scmp.lt.s32.totalorder %s16, 3
    %p301 = pnand %p299, %p300
    %p302 = pneg %p301
    // Predicated region
    $region53: #{tpu_custom_call.1} parent=5 // pred_check
      _
    $region54: #{tpu_custom_call.1} parent=5 // pred_check_branch
      %304 = sbr.rel (%p301) target = $region56
    $region55: #{tpu_custom_call.1} parent=5 // pred_region
      %s305 = ssub.s32 %s16, 1
      %s306 = smul.u32 16, %s21
      %p307 = scmp.lt.s32.totalorder %s306, 31
      %s308 = scalar_select %p307, %s306, 31
      %s309 = smul.addr %s308, 8
      %s310 = scalar_lea.vmem %s0, %s309
      %p311 = pneg %p42
      %p312 = pneg %p39
      %s313 = smul.u32 16, %s21
      %p314 = scmp.lt.s32.totalorder %s313, 31
      %s315 = scalar_select %p314, %s313, 31
      %s316 = smul.addr %s315, 8
      %s317 = scalar_lea.vmem %s1, %s316
      %p318 = pneg %p68
      %p319 = pneg %p65
      %p320 = pneg %p89
      %p321 = pneg %p86
      %p322 = pneg %p110
      %p323 = pneg %p107
      %p324 = pneg %p131
      %p325 = pneg %p128
      %p326 = pneg %p152
      %p327 = pneg %p149
      %p328 = pneg %p173
      %p329 = pneg %p170
      %p330 = pneg %p194
      %p331 = pneg %p191
      %p332 = pneg %p215
      %p333 = pneg %p212
      %p334 = pneg %p241
      %p335 = pneg %p238
      %s336 = smul.u32 16, %s21
      %p337 = scmp.lt.s32.totalorder %s336, 31
      %s338 = scalar_select %p337, %s336, 31
      %s339 = smul.addr %s338, 8
      %s340 = scalar_lea.vmem %s9, %s339
      %s341 = smul.u32 16, %s21
      %p342 = scmp.lt.s32.totalorder %s341, 31
      %s343 = scalar_select %p342, %s341, 31
      %s344 = smul.addr %s343, 8
      %s345 = scalar_lea.vmem %s0, %s344
      %s346 = smul.u32 16, %s21
      %s347 = smul.u32 16, %s21
      %p348 = scmp.lt.s32.totalorder %s347, 31
      %s349 = scalar_select %p348, %s347, 31
      %s350 = smul.addr %s349, 8
      %s351 = scalar_lea.vmem %s1, %s350
      %s352 = smul.u32 16, %s21
      %s353 = smul.u32 16, %s21
      %p354 = scmp.lt.s32.totalorder %s353, 31
      %s355 = scalar_select %p354, %s353, 31
      %s356 = smul.addr %s355, 8
      %s357 = scalar_lea.vmem %s9, %s356
      %s358 = smul.u32 16, %s21
      %v359 = vld [vmem:[%s345] sm:$0xff]
      %v360 = vld [vmem:[%s345 + $0x8] sm:$0xff]
      %v361 = vld [vmem:[%s345 + $0x10] sm:$0xff]
      %v362 = vld [vmem:[%s345 + $0x18] sm:$0xff]
      %v363 = vld [vmem:[%s345 + $0x20] sm:$0xff]
      %v364 = vld [vmem:[%s345 + $0x28] sm:$0xff]
      %v365 = vld [vmem:[%s345 + $0x30] sm:$0xff]
      %v366 = vld [vmem:[%s345 + $0x38] sm:$0xff]
      %v367 = vld [vmem:[%s345 + $0x40] sm:$0xff]
      %v368 = vld [vmem:[%s345 + $0x48] sm:$0xff]
      %v369 = vld [vmem:[%s345 + $0x50] sm:$0xff]
      %v370 = vld [vmem:[%s345 + $0x58] sm:$0xff]
      %v371 = vld [vmem:[%s345 + $0x60] sm:$0xff]
      %v372 = vld [vmem:[%s345 + $0x68] sm:$0xff]
      %v373 = vld [vmem:[%s345 + $0x70] sm:$0xff]
      %v374 = vld [vmem:[%s345 + $0x78] sm:$0xff]
      %v375 = vld [vmem:[%s2] sm:$0xff]
      %v376 = vld [vmem:[%s2 + $0x8] sm:$0xff]
      %v377 = vld [vmem:[%s2 + $0x10] sm:$0xff]
      %v378 = vld [vmem:[%s2 + $0x18] sm:$0xff]
      %v379 = vld [vmem:[%s2 + $0x20] sm:$0xff]
      %v380 = vld [vmem:[%s2 + $0x28] sm:$0xff]
      %v381 = vld [vmem:[%s2 + $0x30] sm:$0xff]
      %v382 = vld [vmem:[%s2 + $0x38] sm:$0xff]
      %v383 = vld [vmem:[%s2 + $0x40] sm:$0xff]
      %v384 = vld [vmem:[%s2 + $0x48] sm:$0xff]
      %v385 = vld [vmem:[%s2 + $0x50] sm:$0xff]
      %v386 = vld [vmem:[%s2 + $0x58] sm:$0xff]
      %v387 = vld [vmem:[%s351] sm:$0xff]
      %v388 = vld [vmem:[%s351 + $0x8] sm:$0xff]
      %v389 = vld [vmem:[%s351 + $0x10] sm:$0xff]
      %v390 = vld [vmem:[%s351 + $0x18] sm:$0xff]
      %v391 = vld [vmem:[%s351 + $0x20] sm:$0xff]
      %v392 = vld [vmem:[%s351 + $0x28] sm:$0xff]
      %v393 = vld [vmem:[%s351 + $0x30] sm:$0xff]
      %v394 = vld [vmem:[%s351 + $0x38] sm:$0xff]
      %v395 = vld [vmem:[%s351 + $0x40] sm:$0xff]
      %v396 = vld [vmem:[%s351 + $0x48] sm:$0xff]
      %v397 = vld [vmem:[%s351 + $0x50] sm:$0xff]
      %v398 = vld [vmem:[%s351 + $0x58] sm:$0xff]
      %v399 = vld [vmem:[%s351 + $0x60] sm:$0xff]
      %v400 = vld [vmem:[%s351 + $0x68] sm:$0xff]
      %v401 = vld [vmem:[%s351 + $0x70] sm:$0xff]
      %v402 = vld [vmem:[%s351 + $0x78] sm:$0xff]
      %v403 = vld [vmem:[%s3] sm:$0xff]
      %405 = vst [vmem:[#allocation1] ss:$2 sm:$0xff] %v403
      %v406 = vld.sshfl [vmem:[#allocation1] sm:$0xff pattern:$0x75316420]
      %v407 = vld.sshfl [vmem:[#allocation1 + $0x8] sm:$0xff pattern:$0x75316420]
      %vm408 = vcmask 31744
      %v410 = vsel %vm408, %v387, 0
      %v413 = vsel %vm408, %v388, 0
      %v416 = vsel %vm408, %v389, 0
      %v419 = vsel %vm408, %v390, 0
      %v422 = vsel %vm408, %v391, 0
      %v425 = vsel %vm408, %v392, 0
      %v428 = vsel %vm408, %v393, 0
      %v431 = vsel %vm408, %v394, 0
      %v434 = vsel %vm408, %v395, 0
      %v437 = vsel %vm408, %v396, 0
      %v440 = vsel %vm408, %v397, 0
      %v443 = vsel %vm408, %v398, 0
      %v446 = vsel %vm408, %v399, 0
      %v449 = vsel %vm408, %v400, 0
      %v452 = vsel %vm408, %v401, 0
      %v455 = vsel %vm408, %v402, 0
      %vm457 = vcmask 1043456
      %v458 = vsel %vm457, %v406, 0
      %v460 = vsel %vm457, %v407, 0
      %462 = vmatpush.msra.mxu0 0.0
      %463 = vmatpush.msra.mxu0 0.0
      %464 = vmatpush.msra.mxu0 0.0
      %465 = vmatpush.msra.mxu0 0.0
      %466 = vmatpush.msra.mxu0 0.0
      %467 = vmatpush.msra.mxu0 0.0
      %468 = vmatpush.msra.mxu0 0.0
      %469 = vmatpush.msra.mxu0 0.0
      %470 = vmatpush.msra.mxu0 0.0
      %471 = vmatpush.msra.mxu0 0.0
      %472 = vmatpush.msra.mxu0 0.0
      %473 = vmatpush.msra.mxu0 0.0
      %474 = vmatpush.msra.mxu0 0.0
      %475 = vmatpush.msra.mxu0 0.0
      %476 = vmatpush.msra.mxu0 0.0
      %477 = vmatpush.msra.mxu0 %v458
      %478 = vmatmul.f32.gmra.mxu0 %v410
      %v479 = vpop.f32.mrf.mxu0
      %v480 = vadd.f32 0.0, %v479
      %481 = vmatmul.f32.gmra.mxu0 %v413
      %v482 = vpop.f32.mrf.mxu0
      %v483 = vadd.f32 0.0, %v482
      %484 = vmatmul.f32.gmra.mxu0 %v416
      %v485 = vpop.f32.mrf.mxu0
      %v486 = vadd.f32 0.0, %v485
      %487 = vmatmul.f32.gmra.mxu0 %v419
      %v488 = vpop.f32.mrf.mxu0
      %v489 = vadd.f32 0.0, %v488
      %490 = vmatmul.f32.gmra.mxu0 %v422
      %v491 = vpop.f32.mrf.mxu0
      %v492 = vadd.f32 0.0, %v491
      %493 = vmatmul.f32.gmra.mxu0 %v425
      %v494 = vpop.f32.mrf.mxu0
      %v495 = vadd.f32 0.0, %v494
      %496 = vmatmul.f32.gmra.mxu0 %v428
      %v497 = vpop.f32.mrf.mxu0
      %v498 = vadd.f32 0.0, %v497
      %499 = vmatmul.f32.gmra.mxu0 %v431
      %v500 = vpop.f32.mrf.mxu0
      %v501 = vadd.f32 0.0, %v500
      %502 = vmatmul.f32.gmra.mxu0 %v434
      %v503 = vpop.f32.mrf.mxu0
      %v504 = vadd.f32 0.0, %v503
      %505 = vmatmul.f32.gmra.mxu0 %v437
      %v506 = vpop.f32.mrf.mxu0
      %v507 = vadd.f32 0.0, %v506
      %508 = vmatmul.f32.gmra.mxu0 %v440
      %v509 = vpop.f32.mrf.mxu0
      %v510 = vadd.f32 0.0, %v509
      %511 = vmatmul.f32.gmra.mxu0 %v443
      %v512 = vpop.f32.mrf.mxu0
      %v513 = vadd.f32 0.0, %v512
      %514 = vmatmul.f32.gmra.mxu0 %v446
      %v515 = vpop.f32.mrf.mxu0
      %v516 = vadd.f32 0.0, %v515
      %517 = vmatmul.f32.gmra.mxu0 %v449
      %v518 = vpop.f32.mrf.mxu0
      %v519 = vadd.f32 0.0, %v518
      %520 = vmatmul.f32.gmra.mxu0 %v452
      %v521 = vpop.f32.mrf.mxu0
      %v522 = vadd.f32 0.0, %v521
      %523 = vmatmul.f32.gmra.mxu0 %v455
      %v524 = vpop.f32.mrf.mxu0
      %v525 = vadd.f32 0.0, %v524
      %526 = vdwg.mxu0
      %527 = vmatpush.msra.mxu0 0.0
      %528 = vmatpush.msra.mxu0 0.0
      %529 = vmatpush.msra.mxu0 0.0
      %530 = vmatpush.msra.mxu0 0.0
      %531 = vmatpush.msra.mxu0 0.0
      %532 = vmatpush.msra.mxu0 0.0
      %533 = vmatpush.msra.mxu0 0.0
      %534 = vmatpush.msra.mxu0 0.0
      %535 = vmatpush.msra.mxu0 0.0
      %536 = vmatpush.msra.mxu0 0.0
      %537 = vmatpush.msra.mxu0 0.0
      %538 = vmatpush.msra.mxu0 0.0
      %539 = vmatpush.msra.mxu0 0.0
      %540 = vmatpush.msra.mxu0 0.0
      %541 = vmatpush.msra.mxu0 0.0
      %542 = vmatpush.msra.mxu0 %v460
      %543 = vmatmul.f32.gmra.mxu0 %v410
      %v544 = vpop.f32.mrf.mxu0
      %v545 = vadd.f32 0.0, %v544
      %546 = vmatmul.f32.gmra.mxu0 %v413
      %v547 = vpop.f32.mrf.mxu0
      %v548 = vadd.f32 0.0, %v547
      %549 = vmatmul.f32.gmra.mxu0 %v416
      %v550 = vpop.f32.mrf.mxu0
      %v551 = vadd.f32 0.0, %v550
      %552 = vmatmul.f32.gmra.mxu0 %v419
      %v553 = vpop.f32.mrf.mxu0
      %v554 = vadd.f32 0.0, %v553
      %555 = vmatmul.f32.gmra.mxu0 %v422
      %v556 = vpop.f32.mrf.mxu0
      %v557 = vadd.f32 0.0, %v556
      %558 = vmatmul.f32.gmra.mxu0 %v425
      %v559 = vpop.f32.mrf.mxu0
      %v560 = vadd.f32 0.0, %v559
      %561 = vmatmul.f32.gmra.mxu0 %v428
      %v562 = vpop.f32.mrf.mxu0
      %v563 = vadd.f32 0.0, %v562
      %564 = vmatmul.f32.gmra.mxu0 %v431
      %v565 = vpop.f32.mrf.mxu0
      %v566 = vadd.f32 0.0, %v565
      %567 = vmatmul.f32.gmra.mxu0 %v434
      %v568 = vpop.f32.mrf.mxu0
      %v569 = vadd.f32 0.0, %v568
      %570 = vmatmul.f32.gmra.mxu0 %v437
      %v571 = vpop.f32.mrf.mxu0
      %v572 = vadd.f32 0.0, %v571
      %573 = vmatmul.f32.gmra.mxu0 %v440
      %v574 = vpop.f32.mrf.mxu0
      %v575 = vadd.f32 0.0, %v574
      %576 = vmatmul.f32.gmra.mxu0 %v443
      %v577 = vpop.f32.mrf.mxu0
      %v578 = vadd.f32 0.0, %v577
      %579 = vmatmul.f32.gmra.mxu0 %v446
      %v580 = vpop.f32.mrf.mxu0
      %v581 = vadd.f32 0.0, %v580
      %582 = vmatmul.f32.gmra.mxu0 %v449
      %v583 = vpop.f32.mrf.mxu0
      %v584 = vadd.f32 0.0, %v583
      %585 = vmatmul.f32.gmra.mxu0 %v452
      %v586 = vpop.f32.mrf.mxu0
      %v587 = vadd.f32 0.0, %v586
      %588 = vmatmul.f32.gmra.mxu0 %v455
      %v589 = vpop.f32.mrf.mxu0
      %v590 = vadd.f32 0.0, %v589
      %591 = vdwg.mxu0
      %vm592 = vcmask 392192
      %v594 = vsel %vm592, %v359, 0
      %v597 = vsel %vm592, %v360, 0
      %v600 = vsel %vm592, %v361, 0
      %v603 = vsel %vm592, %v362, 0
      %v606 = vsel %vm592, %v363, 0
      %v609 = vsel %vm592, %v364, 0
      %v612 = vsel %vm592, %v365, 0
      %v615 = vsel %vm592, %v366, 0
      %v618 = vsel %vm592, %v367, 0
      %v621 = vsel %vm592, %v368, 0
      %v624 = vsel %vm592, %v369, 0
      %v627 = vsel %vm592, %v370, 0
      %v630 = vsel %vm592, %v371, 0
      %v633 = vsel %vm592, %v372, 0
      %v636 = vsel %vm592, %v373, 0
      %v639 = vsel %vm592, %v374, 0
      %641 = vmatpush.msra.mxu0 0.0
      %642 = vmatpush.msra.mxu0 0.0
      %643 = vmatpush.msra.mxu0 0.0
      %644 = vmatpush.msra.mxu0 0.0
      %645 = vmatpush.msra.mxu0 0.0
      %646 = vmatpush.msra.mxu0 0.0
      %647 = vmatpush.msra.mxu0 0.0
      %648 = vmatpush.msra.mxu0 0.0
      %649 = vmatpush.msra.mxu0 0.0
      %650 = vmatpush.msra.mxu0 0.0
      %651 = vmatpush.msra.mxu0 %v385
      %652 = vmatpush.msra.mxu0 %v383
      %653 = vmatpush.msra.mxu0 %v381
      %654 = vmatpush.msra.mxu0 %v379
      %655 = vmatpush.msra.mxu0 %v377
      %656 = vmatpush.msra.mxu0 %v375
      %657 = vmatmul.f32.gmra.mxu0 %v594
      %v658 = vpop.f32.mrf.mxu0
      %v659 = vadd.f32 %v480, %v658
      %660 = vmatmul.f32.gmra.mxu0 %v597
      %v661 = vpop.f32.mrf.mxu0
      %v662 = vadd.f32 %v483, %v661
      %663 = vmatmul.f32.gmra.mxu0 %v600
      %v664 = vpop.f32.mrf.mxu0
      %v665 = vadd.f32 %v486, %v664
      %666 = vmatmul.f32.gmra.mxu0 %v603
      %v667 = vpop.f32.mrf.mxu0
      %v668 = vadd.f32 %v489, %v667
      %669 = vmatmul.f32.gmra.mxu0 %v606
      %v670 = vpop.f32.mrf.mxu0
      %v671 = vadd.f32 %v492, %v670
      %672 = vmatmul.f32.gmra.mxu0 %v609
      %v673 = vpop.f32.mrf.mxu0
      %v674 = vadd.f32 %v495, %v673
      %675 = vmatmul.f32.gmra.mxu0 %v612
      %v676 = vpop.f32.mrf.mxu0
      %v677 = vadd.f32 %v498, %v676
      %678 = vmatmul.f32.gmra.mxu0 %v615
      %v679 = vpop.f32.mrf.mxu0
      %v680 = vadd.f32 %v501, %v679
      %681 = vmatmul.f32.gmra.mxu0 %v618
      %v682 = vpop.f32.mrf.mxu0
      %v683 = vadd.f32 %v504, %v682
      %684 = vmatmul.f32.gmra.mxu0 %v621
      %v685 = vpop.f32.mrf.mxu0
      %v686 = vadd.f32 %v507, %v685
      %687 = vmatmul.f32.gmra.mxu0 %v624
      %v688 = vpop.f32.mrf.mxu0
      %v689 = vadd.f32 %v510, %v688
      %690 = vmatmul.f32.gmra.mxu0 %v627
      %v691 = vpop.f32.mrf.mxu0
      %v692 = vadd.f32 %v513, %v691
      %693 = vmatmul.f32.gmra.mxu0 %v630
      %v694 = vpop.f32.mrf.mxu0
      %v695 = vadd.f32 %v516, %v694
      %696 = vmatmul.f32.gmra.mxu0 %v633
      %v697 = vpop.f32.mrf.mxu0
      %v698 = vadd.f32 %v519, %v697
      %699 = vmatmul.f32.gmra.mxu0 %v636
      %v700 = vpop.f32.mrf.mxu0
      %v701 = vadd.f32 %v522, %v700
      %702 = vmatmul.f32.gmra.mxu0 %v639
      %v703 = vpop.f32.mrf.mxu0
      %v704 = vadd.f32 %v525, %v703
      %705 = vdwg.mxu0
      %706 = vmatpush.msra.mxu0 0.0
      %707 = vmatpush.msra.mxu0 0.0
      %708 = vmatpush.msra.mxu0 0.0
      %709 = vmatpush.msra.mxu0 0.0
      %710 = vmatpush.msra.mxu0 0.0
      %711 = vmatpush.msra.mxu0 0.0
      %712 = vmatpush.msra.mxu0 0.0
      %713 = vmatpush.msra.mxu0 0.0
      %714 = vmatpush.msra.mxu0 0.0
      %715 = vmatpush.msra.mxu0 0.0
      %716 = vmatpush.msra.mxu0 %v386
      %717 = vmatpush.msra.mxu0 %v384
      %718 = vmatpush.msra.mxu0 %v382
      %719 = vmatpush.msra.mxu0 %v380
      %720 = vmatpush.msra.mxu0 %v378
      %721 = vmatpush.msra.mxu0 %v376
      %722 = vmatmul.f32.gmra.mxu0 %v594
      %v723 = vpop.f32.mrf.mxu0
      %v724 = vadd.f32 %v545, %v723
      %725 = vmatmul.f32.gmra.mxu0 %v597
      %v726 = vpop.f32.mrf.mxu0
      %v727 = vadd.f32 %v548, %v726
      %728 = vmatmul.f32.gmra.mxu0 %v600
      %v729 = vpop.f32.mrf.mxu0
      %v730 = vadd.f32 %v551, %v729
      %731 = vmatmul.f32.gmra.mxu0 %v603
      %v732 = vpop.f32.mrf.mxu0
      %v733 = vadd.f32 %v554, %v732
      %734 = vmatmul.f32.gmra.mxu0 %v606
      %v735 = vpop.f32.mrf.mxu0
      %v736 = vadd.f32 %v557, %v735
      %737 = vmatmul.f32.gmra.mxu0 %v609
      %v738 = vpop.f32.mrf.mxu0
      %v739 = vadd.f32 %v560, %v738
      %740 = vmatmul.f32.gmra.mxu0 %v612
      %v741 = vpop.f32.mrf.mxu0
      %v742 = vadd.f32 %v563, %v741
      %743 = vmatmul.f32.gmra.mxu0 %v615
      %v744 = vpop.f32.mrf.mxu0
      %v745 = vadd.f32 %v566, %v744
      %746 = vmatmul.f32.gmra.mxu0 %v618
      %v747 = vpop.f32.mrf.mxu0
      %v748 = vadd.f32 %v569, %v747
      %749 = vmatmul.f32.gmra.mxu0 %v621
      %v750 = vpop.f32.mrf.mxu0
      %v751 = vadd.f32 %v572, %v750
      %752 = vmatmul.f32.gmra.mxu0 %v624
      %v753 = vpop.f32.mrf.mxu0
      %v754 = vadd.f32 %v575, %v753
      %755 = vmatmul.f32.gmra.mxu0 %v627
      %v756 = vpop.f32.mrf.mxu0
      %v757 = vadd.f32 %v578, %v756
      %758 = vmatmul.f32.gmra.mxu0 %v630
      %v759 = vpop.f32.mrf.mxu0
      %v760 = vadd.f32 %v581, %v759
      %761 = vmatmul.f32.gmra.mxu0 %v633
      %v762 = vpop.f32.mrf.mxu0
      %v763 = vadd.f32 %v584, %v762
      %764 = vmatmul.f32.gmra.mxu0 %v636
      %v765 = vpop.f32.mrf.mxu0
      %v766 = vadd.f32 %v587, %v765
      %767 = vmatmul.f32.gmra.mxu0 %v639
      %v768 = vpop.f32.mrf.mxu0
      %v769 = vadd.f32 %v590, %v768
      %770 = vdwg.mxu0
      %v771 = vld [vmem:[%s4] sm:$0x3]
      %v773 = vperm.slane %v771, 0
      %v774 = vperm.slane %v771, 1
      %v777 = vadd.f32 %v659, %v773
      %v778 = vadd.f32 %v724, %v774
      %v779 = vadd.f32 %v662, %v773
      %v780 = vadd.f32 %v727, %v774
      %v781 = vadd.f32 %v665, %v773
      %v782 = vadd.f32 %v730, %v774
      %v783 = vadd.f32 %v668, %v773
      %v784 = vadd.f32 %v733, %v774
      %v785 = vadd.f32 %v671, %v773
      %v786 = vadd.f32 %v736, %v774
      %v787 = vadd.f32 %v674, %v773
      %v788 = vadd.f32 %v739, %v774
      %v789 = vadd.f32 %v677, %v773
      %v790 = vadd.f32 %v742, %v774
      %v791 = vadd.f32 %v680, %v773
      %v792 = vadd.f32 %v745, %v774
      %v793 = vadd.f32 %v683, %v773
      %v794 = vadd.f32 %v748, %v774
      %v795 = vadd.f32 %v686, %v773
      %v796 = vadd.f32 %v751, %v774
      %v797 = vadd.f32 %v689, %v773
      %v798 = vadd.f32 %v754, %v774
      %v799 = vadd.f32 %v692, %v773
      %v800 = vadd.f32 %v757, %v774
      %v801 = vadd.f32 %v695, %v773
      %v802 = vadd.f32 %v760, %v774
      %v803 = vadd.f32 %v698, %v773
      %v804 = vadd.f32 %v763, %v774
      %v805 = vadd.f32 %v701, %v773
      %v806 = vadd.f32 %v766, %v774
      %v807 = vadd.f32 %v704, %v773
      %v808 = vadd.f32 %v769, %v774
      %v809 = vmax.f32 %v777, 0.0
      %v810 = vmax.f32 %v778, 0.0
      %v811 = vmax.f32 %v779, 0.0
      %v812 = vmax.f32 %v780, 0.0
      %v813 = vmax.f32 %v781, 0.0
      %v814 = vmax.f32 %v782, 0.0
      %v815 = vmax.f32 %v783, 0.0
      %v816 = vmax.f32 %v784, 0.0
      %v817 = vmax.f32 %v785, 0.0
      %v818 = vmax.f32 %v786, 0.0
      %v819 = vmax.f32 %v787, 0.0
      %v820 = vmax.f32 %v788, 0.0
      %v821 = vmax.f32 %v789, 0.0
      %v822 = vmax.f32 %v790, 0.0
      %v823 = vmax.f32 %v791, 0.0
      %v824 = vmax.f32 %v792, 0.0
      %v825 = vmax.f32 %v793, 0.0
      %v826 = vmax.f32 %v794, 0.0
      %v827 = vmax.f32 %v795, 0.0
      %v828 = vmax.f32 %v796, 0.0
      %v829 = vmax.f32 %v797, 0.0
      %v830 = vmax.f32 %v798, 0.0
      %v831 = vmax.f32 %v799, 0.0
      %v832 = vmax.f32 %v800, 0.0
      %v833 = vmax.f32 %v801, 0.0
      %v834 = vmax.f32 %v802, 0.0
      %v835 = vmax.f32 %v803, 0.0
      %v836 = vmax.f32 %v804, 0.0
      %v837 = vmax.f32 %v805, 0.0
      %v838 = vmax.f32 %v806, 0.0
      %v839 = vmax.f32 %v807, 0.0
      %v840 = vmax.f32 %v808, 0.0
      %v841 = vld [vmem:[%s5] sm:$0xff]
      %v842 = vld [vmem:[%s5 + $0x8] sm:$0xff]
      %v843 = vld [vmem:[%s5 + $0x10] sm:$0xff]
      %v844 = vld [vmem:[%s5 + $0x18] sm:$0xff]
      %v845 = vld [vmem:[%s5 + $0x20] sm:$0xff]
      %v846 = vld [vmem:[%s5 + $0x28] sm:$0xff]
      %v847 = vld [vmem:[%s5 + $0x30] sm:$0xff]
      %v848 = vld [vmem:[%s5 + $0x38] sm:$0xff]
      %v849 = vld [vmem:[%s5 + $0x40] sm:$0xff]
      %v850 = vld [vmem:[%s5 + $0x48] sm:$0xff]
      %v851 = vld [vmem:[%s5 + $0x50] sm:$0xff]
      %v852 = vld [vmem:[%s5 + $0x58] sm:$0xff]
      %v853 = vld [vmem:[%s5 + $0x60] sm:$0xff]
      %v854 = vld [vmem:[%s5 + $0x68] sm:$0xff]
      %v855 = vld [vmem:[%s5 + $0x70] sm:$0xff]
      %v856 = vld [vmem:[%s5 + $0x78] sm:$0xff]
      %v857 = vld [vmem:[%s5 + $0x80] sm:$0xff]
      %v858 = vld [vmem:[%s5 + $0x88] sm:$0xff]
      %v859 = vld [vmem:[%s5 + $0x90] sm:$0xff]
      %v860 = vld [vmem:[%s5 + $0x98] sm:$0xff]
      %v861 = vld [vmem:[%s5 + $0xa0] sm:$0xff]
      %v862 = vld [vmem:[%s5 + $0xa8] sm:$0xff]
      %v863 = vld [vmem:[%s5 + $0xb0] sm:$0xff]
      %v864 = vld [vmem:[%s5 + $0xb8] sm:$0xff]
      %v865 = vld [vmem:[%s5 + $0xc0] sm:$0xff]
      %v866 = vld [vmem:[%s5 + $0xc8] sm:$0xff]
      %v867 = vld [vmem:[%s5 + $0xd0] sm:$0xff]
      %v868 = vld [vmem:[%s5 + $0xd8] sm:$0xff]
      %v869 = vld [vmem:[%s5 + $0xe0] sm:$0xff]
      %v870 = vld [vmem:[%s5 + $0xe8] sm:$0xff]
      %v871 = vld [vmem:[%s5 + $0xf0] sm:$0xff]
      %v872 = vld [vmem:[%s5 + $0xf8] sm:$0xff]
      %v873 = vld [vmem:[%s6] sm:$0x1]
      %v875 = vperm.slane %v873, 0
      %877 = vmatpush.msra.mxu0 %v856
      %878 = vmatpush.msra.mxu0 %v855
      %879 = vmatpush.msra.mxu0 %v854
      %880 = vmatpush.msra.mxu0 %v853
      %881 = vmatpush.msra.mxu0 %v852
      %882 = vmatpush.msra.mxu0 %v851
      %883 = vmatpush.msra.mxu0 %v850
      %884 = vmatpush.msra.mxu0 %v849
      %885 = vmatpush.msra.mxu0 %v848
      %886 = vmatpush.msra.mxu0 %v847
      %887 = vmatpush.msra.mxu0 %v846
      %888 = vmatpush.msra.mxu0 %v845
      %889 = vmatpush.msra.mxu0 %v844
      %890 = vmatpush.msra.mxu0 %v843
      %891 = vmatpush.msra.mxu0 %v842
      %892 = vmatpush.msra.mxu0 %v841
      %893 = vmatmul.f32.gmra.mxu0 %v809
      %v894 = vpop.f32.mrf.mxu0
      %v895 = vadd.f32 %v875, %v894
      %896 = vmatmul.f32.gmra.mxu0 %v811
      %v897 = vpop.f32.mrf.mxu0
      %v898 = vadd.f32 %v875, %v897
      %899 = vmatmul.f32.gmra.mxu0 %v813
      %v900 = vpop.f32.mrf.mxu0
      %v901 = vadd.f32 %v875, %v900
      %902 = vmatmul.f32.gmra.mxu0 %v815
      %v903 = vpop.f32.mrf.mxu0
      %v904 = vadd.f32 %v875, %v903
      %905 = vmatmul.f32.gmra.mxu0 %v817
      %v906 = vpop.f32.mrf.mxu0
      %v907 = vadd.f32 %v875, %v906
      %908 = vmatmul.f32.gmra.mxu0 %v819
      %v909 = vpop.f32.mrf.mxu0
      %v910 = vadd.f32 %v875, %v909
      %911 = vmatmul.f32.gmra.mxu0 %v821
      %v912 = vpop.f32.mrf.mxu0
      %v913 = vadd.f32 %v875, %v912
      %914 = vmatmul.f32.gmra.mxu0 %v823
      %v915 = vpop.f32.mrf.mxu0
      %v916 = vadd.f32 %v875, %v915
      %917 = vmatmul.f32.gmra.mxu0 %v825
      %v918 = vpop.f32.mrf.mxu0
      %v919 = vadd.f32 %v875, %v918
      %920 = vmatmul.f32.gmra.mxu0 %v827
      %v921 = vpop.f32.mrf.mxu0
      %v922 = vadd.f32 %v875, %v921
      %923 = vmatmul.f32.gmra.mxu0 %v829
      %v924 = vpop.f32.mrf.mxu0
      %v925 = vadd.f32 %v875, %v924
      %926 = vmatmul.f32.gmra.mxu0 %v831
      %v927 = vpop.f32.mrf.mxu0
      %v928 = vadd.f32 %v875, %v927
      %929 = vmatmul.f32.gmra.mxu0 %v833
      %v930 = vpop.f32.mrf.mxu0
      %v931 = vadd.f32 %v875, %v930
      %932 = vmatmul.f32.gmra.mxu0 %v835
      %v933 = vpop.f32.mrf.mxu0
      %v934 = vadd.f32 %v875, %v933
      %935 = vmatmul.f32.gmra.mxu0 %v837
      %v936 = vpop.f32.mrf.mxu0
      %v937 = vadd.f32 %v875, %v936
      %938 = vmatmul.f32.gmra.mxu0 %v839
      %v939 = vpop.f32.mrf.mxu0
      %v940 = vadd.f32 %v875, %v939
      %941 = vdwg.mxu0
      %942 = vmatpush.msra.mxu0 %v872
      %943 = vmatpush.msra.mxu0 %v871
      %944 = vmatpush.msra.mxu0 %v870
      %945 = vmatpush.msra.mxu0 %v869
      %946 = vmatpush.msra.mxu0 %v868
      %947 = vmatpush.msra.mxu0 %v867
      %948 = vmatpush.msra.mxu0 %v866
      %949 = vmatpush.msra.mxu0 %v865
      %950 = vmatpush.msra.mxu0 %v864
      %951 = vmatpush.msra.mxu0 %v863
      %952 = vmatpush.msra.mxu0 %v862
      %953 = vmatpush.msra.mxu0 %v861
      %954 = vmatpush.msra.mxu0 %v860
      %955 = vmatpush.msra.mxu0 %v859
      %956 = vmatpush.msra.mxu0 %v858
      %957 = vmatpush.msra.mxu0 %v857
      %958 = vmatmul.f32.gmra.mxu0 %v810
      %v959 = vpop.f32.mrf.mxu0
      %v960 = vadd.f32 %v895, %v959
      %961 = vmatmul.f32.gmra.mxu0 %v812
      %v962 = vpop.f32.mrf.mxu0
      %v963 = vadd.f32 %v898, %v962
      %964 = vmatmul.f32.gmra.mxu0 %v814
      %v965 = vpop.f32.mrf.mxu0
      %v966 = vadd.f32 %v901, %v965
      %967 = vmatmul.f32.gmra.mxu0 %v816
      %v968 = vpop.f32.mrf.mxu0
      %v969 = vadd.f32 %v904, %v968
      %970 = vmatmul.f32.gmra.mxu0 %v818
      %v971 = vpop.f32.mrf.mxu0
      %v972 = vadd.f32 %v907, %v971
      %973 = vmatmul.f32.gmra.mxu0 %v820
      %v974 = vpop.f32.mrf.mxu0
      %v975 = vadd.f32 %v910, %v974
      %976 = vmatmul.f32.gmra.mxu0 %v822
      %v977 = vpop.f32.mrf.mxu0
      %v978 = vadd.f32 %v913, %v977
      %979 = vmatmul.f32.gmra.mxu0 %v824
      %v980 = vpop.f32.mrf.mxu0
      %v981 = vadd.f32 %v916, %v980
      %982 = vmatmul.f32.gmra.mxu0 %v826
      %v983 = vpop.f32.mrf.mxu0
      %v984 = vadd.f32 %v919, %v983
      %985 = vmatmul.f32.gmra.mxu0 %v828
      %v986 = vpop.f32.mrf.mxu0
      %v987 = vadd.f32 %v922, %v986
      %988 = vmatmul.f32.gmra.mxu0 %v830
      %v989 = vpop.f32.mrf.mxu0
      %v990 = vadd.f32 %v925, %v989
      %991 = vmatmul.f32.gmra.mxu0 %v832
      %v992 = vpop.f32.mrf.mxu0
      %v993 = vadd.f32 %v928, %v992
      %994 = vmatmul.f32.gmra.mxu0 %v834
      %v995 = vpop.f32.mrf.mxu0
      %v996 = vadd.f32 %v931, %v995
      %997 = vmatmul.f32.gmra.mxu0 %v836
      %v998 = vpop.f32.mrf.mxu0
      %v999 = vadd.f32 %v934, %v998
      %1000 = vmatmul.f32.gmra.mxu0 %v838
      %v1001 = vpop.f32.mrf.mxu0
      %v1002 = vadd.f32 %v937, %v1001
      %1003 = vmatmul.f32.gmra.mxu0 %v840
      %v1004 = vpop.f32.mrf.mxu0
      %v1005 = vadd.f32 %v940, %v1004
      %1006 = vdwg.mxu0
      %v1007 = vmax.f32 %v960, 0.0
      %v1008 = vmax.f32 %v963, 0.0
      %v1009 = vmax.f32 %v966, 0.0
      %v1010 = vmax.f32 %v969, 0.0
      %v1011 = vmax.f32 %v972, 0.0
      %v1012 = vmax.f32 %v975, 0.0
      %v1013 = vmax.f32 %v978, 0.0
      %v1014 = vmax.f32 %v981, 0.0
      %v1015 = vmax.f32 %v984, 0.0
      %v1016 = vmax.f32 %v987, 0.0
      %v1017 = vmax.f32 %v990, 0.0
      %v1018 = vmax.f32 %v993, 0.0
      %v1019 = vmax.f32 %v996, 0.0
      %v1020 = vmax.f32 %v999, 0.0
      %v1021 = vmax.f32 %v1002, 0.0
      %v1022 = vmax.f32 %v1005, 0.0
      %v1023 = vld [vmem:[%s7] sm:$0x1]
      %v1025 = vperm.slane %v1023, 0
      %v1027 = vmul.f32 %v1007, %v1025
      %v1028 = vmul.f32 %v1008, %v1025
      %v1029 = vmul.f32 %v1009, %v1025
      %v1030 = vmul.f32 %v1010, %v1025
      %v1031 = vmul.f32 %v1011, %v1025
      %v1032 = vmul.f32 %v1012, %v1025
      %v1033 = vmul.f32 %v1013, %v1025
      %v1034 = vmul.f32 %v1014, %v1025
      %v1035 = vmul.f32 %v1015, %v1025
      %v1036 = vmul.f32 %v1016, %v1025
      %v1037 = vmul.f32 %v1017, %v1025
      %v1038 = vmul.f32 %v1018, %v1025
      %v1039 = vmul.f32 %v1019, %v1025
      %v1040 = vmul.f32 %v1020, %v1025
      %v1041 = vmul.f32 %v1021, %v1025
      %v1042 = vmul.f32 %v1022, %v1025
      %1043 = vadd.xlane.f32.xlu0 %v1027
      %v1044 = vpop.xlane.xlu0 %1043
      %1045 = vadd.xlane.f32.xlu0 %v1028
      %v1046 = vpop.xlane.xlu0 %1045
      %1047 = vadd.xlane.f32.xlu0 %v1029
      %v1048 = vpop.xlane.xlu0 %1047
      %1049 = vadd.xlane.f32.xlu0 %v1030
      %v1050 = vpop.xlane.xlu0 %1049
      %1051 = vadd.xlane.f32.xlu0 %v1031
      %v1052 = vpop.xlane.xlu0 %1051
      %1053 = vadd.xlane.f32.xlu0 %v1032
      %v1054 = vpop.xlane.xlu0 %1053
      %1055 = vadd.xlane.f32.xlu0 %v1033
      %v1056 = vpop.xlane.xlu0 %1055
      %1057 = vadd.xlane.f32.xlu0 %v1034
      %v1058 = vpop.xlane.xlu0 %1057
      %1059 = vadd.xlane.f32.xlu0 %v1035
      %v1060 = vpop.xlane.xlu0 %1059
      %1061 = vadd.xlane.f32.xlu0 %v1036
      %v1062 = vpop.xlane.xlu0 %1061
      %1063 = vadd.xlane.f32.xlu0 %v1037
      %v1064 = vpop.xlane.xlu0 %1063
      %1065 = vadd.xlane.f32.xlu0 %v1038
      %v1066 = vpop.xlane.xlu0 %1065
      %1067 = vadd.xlane.f32.xlu0 %v1039
      %v1068 = vpop.xlane.xlu0 %1067
      %1069 = vadd.xlane.f32.xlu0 %v1040
      %v1070 = vpop.xlane.xlu0 %1069
      %1071 = vadd.xlane.f32.xlu0 %v1041
      %v1072 = vpop.xlane.xlu0 %1071
      %1073 = vadd.xlane.f32.xlu0 %v1042
      %v1074 = vpop.xlane.xlu0 %1073
      %s1075 = sld [smem:[#allocation2]]
      %v1076 = vstv %s1075
      %v1077 = vadd.f32 %v1044, %v1076
      %v1078 = vadd.f32 %v1046, %v1076
      %v1079 = vadd.f32 %v1048, %v1076
      %v1080 = vadd.f32 %v1050, %v1076
      %v1081 = vadd.f32 %v1052, %v1076
      %v1082 = vadd.f32 %v1054, %v1076
      %v1083 = vadd.f32 %v1056, %v1076
      %v1084 = vadd.f32 %v1058, %v1076
      %v1085 = vadd.f32 %v1060, %v1076
      %v1086 = vadd.f32 %v1062, %v1076
      %v1087 = vadd.f32 %v1064, %v1076
      %v1088 = vadd.f32 %v1066, %v1076
      %v1089 = vadd.f32 %v1068, %v1076
      %v1090 = vadd.f32 %v1070, %v1076
      %v1091 = vadd.f32 %v1072, %v1076
      %v1092 = vadd.f32 %v1074, %v1076
      %vm1093 = vcmask 7168
      %1094 = vst.msk [vmem:[%s357] sm:$0xff] %vm1093, %v1077
      %1095 = vst.msk [vmem:[%s357 + $0x8] sm:$0xff] %vm1093, %v1078
      %1096 = vst.msk [vmem:[%s357 + $0x10] sm:$0xff] %vm1093, %v1079
      %1097 = vst.msk [vmem:[%s357 + $0x18] sm:$0xff] %vm1093, %v1080
      %1098 = vst.msk [vmem:[%s357 + $0x20] sm:$0xff] %vm1093, %v1081
      %1099 = vst.msk [vmem:[%s357 + $0x28] sm:$0xff] %vm1093, %v1082
      %1100 = vst.msk [vmem:[%s357 + $0x30] sm:$0xff] %vm1093, %v1083
      %1101 = vst.msk [vmem:[%s357 + $0x38] sm:$0xff] %vm1093, %v1084
      %1102 = vst.msk [vmem:[%s357 + $0x40] sm:$0xff] %vm1093, %v1085
      %1103 = vst.msk [vmem:[%s357 + $0x48] sm:$0xff] %vm1093, %v1086
      %1104 = vst.msk [vmem:[%s357 + $0x50] sm:$0xff] %vm1093, %v1087
      %1105 = vst.msk [vmem:[%s357 + $0x58] sm:$0xff] %vm1093, %v1088
      %1106 = vst.msk [vmem:[%s357 + $0x60] sm:$0xff] %vm1093, %v1089
      %1107 = vst.msk [vmem:[%s357 + $0x68] sm:$0xff] %vm1093, %v1090
      %1108 = vst.msk [vmem:[%s357 + $0x70] sm:$0xff] %vm1093, %v1091
      %1109 = vst.msk [vmem:[%s357 + $0x78] sm:$0xff] %vm1093, %v1092
      %s1110 = smul.u32 16, %s21
      %p1111 = scmp.lt.s32.totalorder %s1110, 31
      %s1112 = scalar_select %p1111, %s1110, 31
      %s1113 = smul.addr %s1112, 8
      %s1114 = scalar_lea.vmem %s9, %s1113
      // Predicated region
      $region57: #{tpu_custom_call.1} parent=55 // pred_check
        %p1115 = pneg %p238
      $region58: #{tpu_custom_call.1} parent=55 // pred_check_branch
        %1117 = sbr.rel (%p1115) target = $region60
      $region59: #{tpu_custom_call.1} parent=55 // pred_region
        %s1118 = smul.u32 16, %s21
      $region60: #{tpu_custom_call.1} parent=55 // pred_fallthru
        _
    $region56: #{tpu_custom_call.1} parent=5 // pred_fallthru
      _
    %p1119 = scmp.le.s32.totalorder 2, %s16
    // Predicated region
    $region61: #{tpu_custom_call.1} parent=5 // pred_check
      %p1120 = pneg %p1119
    $region62: #{tpu_custom_call.1} parent=5 // pred_check_branch
      %1122 = sbr.rel (%p1120) target = $region64
    $region63: #{tpu_custom_call.1} parent=5 // pred_region
      %s1123 = ssub.s32 %s16, 2
      // Predicated region
      $region65: #{tpu_custom_call.1} parent=63 // pred_check
        %p1124 = pneg %p244
      $region66: #{tpu_custom_call.1} parent=63 // pred_check_branch
        %1126 = sbr.rel (%p1124) target = $region68
      $region67: #{tpu_custom_call.1} parent=63 // pred_region
        %s1127 = smul.u32 16, %s22
        %p1128 = scmp.lt.s32.totalorder %s1127, 31
        %s1129 = scalar_select %p1128, %s1127, 31
        %s1130 = smul.addr %s1129, 8
        %s1131 = scalar_lea.vmem %s9, %s1130
      $region68: #{tpu_custom_call.1} parent=63 // pred_fallthru
        _
    $region64: #{tpu_custom_call.1} parent=5 // pred_fallthru
      _
  $region6: #{tpu_custom_call.1} parent=0 // loop_footer
    %s20 = sadd.s32 1, %s16
  $region7: #{tpu_custom_call.1} parent=0 // loop_footer_branch
    %15 = sbr.rel target = $region3
  $region8: #{tpu_custom_call.1} parent=0 // loop_exit
    _

</llo_original>
